<compile_context>
chip_gen: v6e
topology: v6e:2x2x1
jax: 0.10.0
libtpu: 0.0.40
codegen_flags: <defaults>
</compile_context>

<pallas_src>
import functools
import math

import jax
import jax.numpy as jnp
from jax import lax
from jax.experimental import pallas as pl
from jax.experimental.pallas import tpu as pltpu

EPS = 1e-5  # nn.BatchNorm2d default


# ---------------------------------------------------------------------------
# Pallas kernels
# ---------------------------------------------------------------------------
def _pw_kernel(*refs, n_in, act):
    """Fused multi-input 1x1 conv: act(sum_i x_i @ w_i + b)."""
    xs = refs[:n_in]
    ws = refs[n_in:2 * n_in]
    b_ref = refs[2 * n_in]
    o_ref = refs[2 * n_in + 1]

    acc = jnp.dot(xs[0][...], ws[0][...], preferred_element_type=jnp.float32)
    for i in range(1, n_in):
        acc = acc + jnp.dot(xs[i][...], ws[i][...],
                            preferred_element_type=jnp.float32)
    acc = acc + b_ref[...].astype(jnp.float32)
    if act:
        acc = acc * (1.0 / (1.0 + jnp.exp(-acc)))  # SiLU
    o_ref[...] = acc.astype(o_ref.dtype)


def _conv3x3_kernel(*refs, act, has_res, H, W):
    """3x3 conv (pad=1) as 9 shifted GEMMs + BN bias + SiLU (+ residual)."""
    if has_res:
        xp_ref, w_ref, b_ref, res_ref, o_ref = refs
    else:
        xp_ref, w_ref, b_ref, o_ref = refs
        res_ref = None

    cin = xp_ref.shape[-1]
    cout = o_ref.shape[-1]

    acc = jnp.zeros((H * W, cout), jnp.float32)
    for dy in range(3):
        for dx in range(3):
            patch = xp_ref[0, dy:dy + H, dx:dx + W, :].reshape(H * W, cin)
            acc = acc + jnp.dot(patch, w_ref[dy, dx, :, :],
                                preferred_element_type=jnp.float32)
    acc = acc + b_ref[...].astype(jnp.float32)
    if act:
        acc = acc * (1.0 / (1.0 + jnp.exp(-acc)))  # SiLU
    out = acc.reshape(H, W, cout)
    if has_res:
        out = out + res_ref[0, :, :, :].astype(jnp.float32)
    o_ref[0, :, :, :] = out.astype(o_ref.dtype)


# ---------------------------------------------------------------------------
# Pallas wrappers
# ---------------------------------------------------------------------------
def pw_conv(xs, ws, bias, act, tm=256):
    """Fused 1x1 conv over NHWC inputs; multiple inputs = fused channel concat."""
    N, H, W, _ = xs[0].shape
    M = N * H * W
    cout = ws[0].shape[1]

    xf = [x.reshape(M, x.shape[-1]) for x in xs]
    tm = min(tm, ((M + 7) // 8) * 8)
    Mp = pl.cdiv(M, tm) * tm
    if Mp != M:
        xf = [jnp.pad(x, ((0, Mp - M), (0, 0))) for x in xf]
    b2 = bias.reshape(1, cout)

    n_in = len(xs)
    in_specs = (
        [pl.BlockSpec((tm, x.shape[1]), lambda i: (i, 0)) for x in xf]
        + [pl.BlockSpec(w.shape, lambda i: (0, 0)) for w in ws]
        + [pl.BlockSpec((1, cout), lambda i: (0, 0))]
    )
    out = pl.pallas_call(
        functools.partial(_pw_kernel, n_in=n_in, act=act),
        out_shape=jax.ShapeDtypeStruct((Mp, cout), xs[0].dtype),
        grid=(Mp // tm,),
        in_specs=in_specs,
        out_specs=pl.BlockSpec((tm, cout), lambda i: (i, 0)),
        compiler_params=pltpu.CompilerParams(
            dimension_semantics=("parallel",)),
    )(*xf, *ws, b2)
    return out[:M].reshape(N, H, W, cout)


def conv3x3(x, w, bias, act, residual=None):
    """Fused 3x3 conv (pad=1) + BN bias + SiLU (+ residual) over NHWC."""
    N, H, W, cin = x.shape
    cout = w.shape[-1]
    xp = jnp.pad(x, ((0, 0), (1, 1), (1, 1), (0, 0)))
    b2 = bias.reshape(1, cout)
    has_res = residual is not None

    in_specs = [
        pl.BlockSpec((1, H + 2, W + 2, cin), lambda n: (n, 0, 0, 0)),
        pl.BlockSpec((3, 3, cin, cout), lambda n: (0, 0, 0, 0)),
        pl.BlockSpec((1, cout), lambda n: (0, 0)),
    ]
    args = [xp, w, b2]
    if has_res:
        in_specs.append(pl.BlockSpec((1, H, W, cout), lambda n: (n, 0, 0, 0)))
        args.append(residual)

    return pl.pallas_call(
        functools.partial(_conv3x3_kernel, act=act, has_res=has_res, H=H, W=W),
        out_shape=jax.ShapeDtypeStruct((N, H, W, cout), x.dtype),
        grid=(N,),
        in_specs=in_specs,
        out_specs=pl.BlockSpec((1, H, W, cout), lambda n: (n, 0, 0, 0)),
        compiler_params=pltpu.CompilerParams(
            dimension_semantics=("parallel",)),
    )(*args)


# ---------------------------------------------------------------------------
# BatchNorm folding / RepConvN re-parameterization (wrapper-side weight prep)
# ---------------------------------------------------------------------------
def _bn_scale_bias(bn):
    s = bn["gamma"] / jnp.sqrt(bn["var"] + EPS)
    return s, bn["beta"] - bn["mean"] * s


def fold_1x1(p):
    s, b = _bn_scale_bias(p["bn"])
    return p["w"] * s[None, :], b


def fold_3x3(p):
    s, b = _bn_scale_bias(p["bn"])
    return p["w"] * s[None, None, None, :], b


def fold_repconvn(p):
    s3, b3 = _bn_scale_bias(p["bn3"])
    s1, b1 = _bn_scale_bias(p["bn1"])
    w3 = p["w3"] * s3[None, None, None, :]
    w1 = p["w1"] * s1[None, :]
    return w3.at[1, 1].add(w1), b3 + b1


# ---------------------------------------------------------------------------
# RepNCSPELAN4 forward built from the fused Pallas kernels (NHWC inside)
# ---------------------------------------------------------------------------
def _bottleneck_pallas(x, pb):
    w_eff, b_eff = fold_repconvn(pb["cv1"])          # RepConvN -> single 3x3
    h = conv3x3(x, w_eff, b_eff, act=True)
    w2, b2 = fold_3x3(pb["cv2"])
    return conv3x3(h, w2, b2, act=True, residual=x)  # shortcut fused in kernel


def _repncsp_pallas(x, p):
    wa, ba = fold_1x1(p["cv1"])
    wb, bb = fold_1x1(p["cv2"])
    wc, bc = fold_1x1(p["cv3"])
    a = pw_conv([x], [wa], ba, act=True)
    for pb in p["m"]:
        a = _bottleneck_pallas(a, pb)
    b = pw_conv([x], [wb], bb, act=True)
    c_ = a.shape[-1]
    # cv3 over concat(a, b): concat fused into the GEMM (two weight slabs).
    return pw_conv([a, b], [wc[:c_], wc[c_:]], bc, act=True)


def repncspelan4_pallas(x_nchw, p):
    x = jnp.transpose(x_nchw, (0, 2, 3, 1))          # NCHW -> NHWC (lane-dense C)
    c3, c4, c = p["c3"], p["c4"], p["c"]

    w1, b1 = fold_1x1(p["cv1"])
    y01 = pw_conv([x], [w1], b1, act=True)           # cv1 output = cat(y0, y1)
    y1 = y01[..., c:]                                 # second half feeds cv2 branch

    y2 = _repncsp_pallas(y1, p["cv2_csp"])
    w, b = fold_3x3(p["cv2_conv"])
    y2 = conv3x3(y2, w, b, act=True)

    y3 = _repncsp_pallas(y2, p["cv3_csp"])
    w, b = fold_3x3(p["cv3_conv"])
    y3 = conv3x3(y3, w, b, act=True)

    # cv4 over concat(y0, y1, y2, y3) == concat(y01, y2, y3): fused multi-input GEMM.
    w4, b4 = fold_1x1(p["cv4"])
    out = pw_conv([y01, y2, y3],
                  [w4[:c3], w4[c3:c3 + c4], w4[c3 + c4:]],
                  b4, act=True)
    return jnp.transpose(out, (0, 3, 1, 2))          # back to NCHW


# ---------------------------------------------------------------------------
# Pure-JAX reference (un-fused, NCHW) mirroring the PyTorch module exactly
# ---------------------------------------------------------------------------
def _ref_conv(x, w, bn, act, k):
    if k == 1:
        y = jnp.einsum("nchw,co->nohw", x, w)
    else:
        y = lax.conv_general_dilated(
            x, w, (1, 1), ((1, 1), (1, 1)),
            dimension_numbers=("NCHW", "HWIO", "NCHW"))
    s = bn["gamma"] / jnp.sqrt(bn["var"] + EPS)
    y = y * s[None, :, None, None] + (bn["beta"] - bn["mean"] * s)[None, :, None, None]
    return jax.nn.silu(y) if act else y


def _ref_repconvn(x, p):
    y = (_ref_conv(x, p["w3"], p["bn3"], False, 3)
         + _ref_conv(x, p["w1"], p["bn1"], False, 1))
    return jax.nn.silu(y)


def _ref_bottleneck(x, p):
    h = _ref_repconvn(x, p["cv1"])
    h = _ref_conv(h, p["cv2"]["w"], p["cv2"]["bn"], True, 3)
    return x + h


def _ref_repncsp(x, p):
    a = _ref_conv(x, p["cv1"]["w"], p["cv1"]["bn"], True, 1)
    for pb in p["m"]:
        a = _ref_bottleneck(a, pb)
    b = _ref_conv(x, p["cv2"]["w"], p["cv2"]["bn"], True, 1)
    return _ref_conv(jnp.concatenate([a, b], axis=1),
                     p["cv3"]["w"], p["cv3"]["bn"], True, 1)


def repncspelan4_ref(x, p):
    c = p["c"]
    y = _ref_conv(x, p["cv1"]["w"], p["cv1"]["bn"], True, 1)
    y0, y1 = y[:, :c], y[:, c:]
    y2 = _ref_repncsp(y1, p["cv2_csp"])
    y2 = _ref_conv(y2, p["cv2_conv"]["w"], p["cv2_conv"]["bn"], True, 3)
    y3 = _ref_repncsp(y2, p["cv3_csp"])
    y3 = _ref_conv(y3, p["cv3_conv"]["w"], p["cv3_conv"]["bn"], True, 3)
    return _ref_conv(jnp.concatenate([y0, y1, y2, y3], axis=1),
                     p["cv4"]["w"], p["cv4"]["bn"], True, 1)


# ---------------------------------------------------------------------------
# Parameter construction (deterministic)
# ---------------------------------------------------------------------------
def _make_bn(key, c):
    k1, k2, k3, k4 = jax.random.split(key, 4)
    return dict(gamma=jax.random.uniform(k1, (c,), minval=0.5, maxval=1.5),
                beta=jax.random.normal(k2, (c,)) * 0.1,
                mean=jax.random.normal(k3, (c,)) * 0.1,
                var=jax.random.uniform(k4, (c,), minval=0.5, maxval=1.5))


def _make_conv(key, cin, cout, k):
    kw, kb = jax.random.split(key)
    if k == 1:
        w = jax.random.normal(kw, (cin, cout)) * (1.0 / math.sqrt(cin))
    else:
        w = jax.random.normal(kw, (k, k, cin, cout)) * (1.0 / math.sqrt(cin * k * k))
    return dict(w=w.astype(jnp.float32), bn=_make_bn(kb, cout))


def _make_repconvn(key, cin, cout):
    k3, kb3, k1, kb1 = jax.random.split(key, 4)
    return dict(
        w3=(jax.random.normal(k3, (3, 3, cin, cout)) / math.sqrt(cin * 9)).astype(jnp.float32),
        bn3=_make_bn(kb3, cout),
        w1=(jax.random.normal(k1, (cin, cout)) / math.sqrt(cin)).astype(jnp.float32),
        bn1=_make_bn(kb1, cout))


def _make_bottleneck(key, c):
    k1, k2 = jax.random.split(key)
    return dict(cv1=_make_repconvn(k1, c, c), cv2=_make_conv(k2, c, c, 3))


def _make_repncsp(key, cin, cout, n):
    c_ = cout // 2
    ks = jax.random.split(key, 3 + n)
    return dict(cv1=_make_conv(ks[0], cin, c_, 1),
                cv2=_make_conv(ks[1], cin, c_, 1),
                cv3=_make_conv(ks[2], 2 * c_, cout, 1),
                m=[_make_bottleneck(ks[3 + i], c_) for i in range(n)])


def make_params(key, c1, c2, c3, c4, c5):
    ks = jax.random.split(key, 6)
    return dict(
        c3=c3, c4=c4, c=c3 // 2,
        cv1=_make_conv(ks[0], c1, c3, 1),
        cv2_csp=_make_repncsp(ks[1], c3 // 2, c4, c5),
        cv2_conv=_make_conv(ks[2], c4, c4, 3),
        cv3_csp=_make_repncsp(ks[3], c4, c4, c5),
        cv3_conv=_make_conv(ks[4], c4, c4, 3),
        cv4=_make_conv(ks[5], c3 + 2 * c4, c2, 1),
    )


# ---------------------------------------------------------------------------
if __name__ == "__main__":
    key = jax.random.PRNGKey(0)
    kx, kp = jax.random.split(key)

    # Small shapes consistent with the module: RepNCSPELAN4(c1=16, c2=32, c3=32, c4=16)
    N, c1, H, W = 2, 16, 16, 16
    c2, c3, c4, c5 = 32, 32, 16, 1

    x = jax.random.normal(kx, (N, c1, H, W), dtype=jnp.float32)
    params = make_params(kp, c1, c2, c3, c4, c5)

    y_pallas = repncspelan4_pallas(x, params)
    jax.block_until_ready(y_pallas)

    y_ref = repncspelan4_ref(x, params)
    jax.block_until_ready(y_ref)

    assert y_pallas.shape == (N, c2, H, W), y_pallas.shape
    assert y_pallas.dtype == x.dtype

    err = float(jnp.max(jnp.abs(y_pallas - y_ref)))
    scale = float(jnp.max(jnp.abs(y_ref))) + 1e-6
    assert err / scale < 1e-3, f"mismatch vs reference: max_abs_err={err}, scale={scale}"

    print("KERNEL_OK")
</pallas_src>

<mosaic_0001>
module attributes {stable_mosaic.version = 11 : i64} {
  func.func @_pw_kernel(%arg0: i32, %arg1: memref<256x16xf32, #tpu.memory_space<vmem>>, %arg2: memref<16x32xf32, #tpu.memory_space<vmem>>, %arg3: memref<1x32xf32, #tpu.memory_space<vmem>>, %arg4: memref<256x32xf32, #tpu.memory_space<vmem>>) attributes {dimension_semantics = [#tpu.dimension_semantics<parallel>], iteration_bounds = array<i64: 2>, scalar_prefetch = 0 : i64, scratch_operands = 0 : i64, tpu.core_type = #tpu.core_type<tc>, window_params = [{transform_indices = @transform_0, window_bounds = array<i64: 256, 16>}, {pipeline_mode = #tpu.pipeline_mode<synchronous>, transform_indices = @transform_1, window_bounds = array<i64: 16, 32>}, {pipeline_mode = #tpu.pipeline_mode<synchronous>, transform_indices = @transform_2, window_bounds = array<i64: 1, 32>}, {transform_indices = @transform_3, window_bounds = array<i64: 256, 32>}]} {
    %c0 = arith.constant 0 : index
    %c0_0 = arith.constant 0 : index
    %0 = vector.load %arg1[%c0, %c0_0] : memref<256x16xf32, #tpu.memory_space<vmem>>, vector<256x16xf32>
    %c0_1 = arith.constant 0 : index
    %c0_2 = arith.constant 0 : index
    %1 = vector.load %arg2[%c0_1, %c0_2] : memref<16x32xf32, #tpu.memory_space<vmem>>, vector<16x32xf32>
    %cst = arith.constant dense<0.000000e+00> : vector<256x32xf32>
    %2 = tpu.matmul %0, %1, %cst {dimension_numbers = #tpu.dot_dimension_numbers<[1], [0], [0], [1], [0, 0, 1, 1], [], []>} : vector<256x16xf32>, vector<16x32xf32>, vector<256x32xf32> -> vector<256x32xf32>
    %c0_3 = arith.constant 0 : index
    %c0_4 = arith.constant 0 : index
    %3 = vector.load %arg3[%c0_3, %c0_4] : memref<1x32xf32, #tpu.memory_space<vmem>>, vector<1x32xf32>
    %4 = vector.broadcast %3 : vector<1x32xf32> to vector<256x32xf32>
    %5 = arith.addf %2, %4 : vector<256x32xf32>
    %cst_5 = arith.constant 0.000000e+00 : f32
    %6 = vector.broadcast %cst_5 : f32 to vector<256x32xf32>
    %7 = arith.subf %6, %5 : vector<256x32xf32>
    %8 = math.exp %7 : vector<256x32xf32>
    %cst_6 = arith.constant 1.000000e+00 : f32
    %9 = vector.broadcast %cst_6 : f32 to vector<256x32xf32>
    %10 = arith.addf %9, %8 : vector<256x32xf32>
    %cst_7 = arith.constant 1.000000e+00 : f32
    %11 = vector.broadcast %cst_7 : f32 to vector<256x32xf32>
    %12 = arith.divf %11, %10 : vector<256x32xf32>
    %13 = arith.mulf %5, %12 : vector<256x32xf32>
    %c0_8 = arith.constant 0 : index
    %c0_9 = arith.constant 0 : index
    %14 = vector.load %arg4[%c0_8, %c0_9] : memref<256x32xf32, #tpu.memory_space<vmem>>, vector<256x32xf32>
    tpu.vector_store %arg4[%c0_8, %c0_9], %13 {strides = array<i32>} : memref<256x32xf32, #tpu.memory_space<vmem>>, vector<256x32xf32>,
    return
  }
  func.func @transform_0(%arg0: i32) -> (i32, i32) {
    %c0_i32 = arith.constant 0 : i32
    %c0_i32_0 = arith.constant 0 : i32
    return %arg0, %c0_i32 : i32, i32
  }
  func.func @transform_1(%arg0: i32) -> (i32, i32) {
    %c0_i32 = arith.constant 0 : i32
    %c0_i32_0 = arith.constant 0 : i32
    %c0_i32_1 = arith.constant 0 : i32
    return %c0_i32, %c0_i32_0 : i32, i32
  }
  func.func @transform_2(%arg0: i32) -> (i32, i32) {
    %c0_i32 = arith.constant 0 : i32
    %c0_i32_0 = arith.constant 0 : i32
    %c0_i32_1 = arith.constant 0 : i32
    return %c0_i32, %c0_i32_0 : i32, i32
  }
  func.func @transform_3(%arg0: i32) -> (i32, i32) {
    %c0_i32 = arith.constant 0 : i32
    %c0_i32_0 = arith.constant 0 : i32
    return %arg0, %c0_i32 : i32, i32
  }
}

</mosaic_0001>

<llo_original>
// kernel: tpu_custom_call.1
$region0: #{tpu_custom_call.1}
  #allocation0 [shape = 'u32[]', space=smem, size = 0x4, offset = 0x4, fixed_abs, tag = 'smem constant byte address 0x4 - core index']
  #allocation1 [shape = 'u32[144,128]{1,0:T(1,128)}', space=vmem, size = 0x12000, scoped, tag = 'internal scratch']
  %s0 = inlined_call_operand.vmem [shape: f32[512,16], index: 0, kind: input, shape index: {}]
  %s1 = inlined_call_operand.vmem [shape: f32[16,32], index: 1, kind: input, shape index: {}]
  %s2 = inlined_call_operand.vmem [shape: f32[1,32], index: 2, kind: input, shape index: {}]
  %s3 = inlined_call_operand.vmem [shape: f32[512,32], index: 3, kind: output, shape index: {}]
  %s4 = sld [smem:[#allocation0]]
  $region45: #{tpu_custom_call.1} parent=0
    _
  %s6 = ssub.s32 1, %s4
  %s7 = scalar_select 0, %s6, %s4
  loop: start=0, step=1, limit=4
  $region2: #{tpu_custom_call.1} parent=0 // loop_pre_header
    _
  $region3: #{tpu_custom_call.1} parent=0 // loop_header
    %s9 = sphi 0, %s13
    %p10 = scmp.ge.s32.totalorder %s9, 4
    %s19 = sphi 0, %s21
    %s22 = sphi 0, %s19
    %s23 = sphi 0, %s22
    %s39 = sphi 0, %s23
    %s43 = sphi 0, %s43
    %s45 = sphi 0, %s43
    %s46 = sphi 0, %s45
    %s60 = sphi 0, %s46
    %s64 = sphi 0, %s64
    %s66 = sphi 0, %s64
    %s67 = sphi 0, %s66
    %s81 = sphi 0, %s67
    %s87 = sphi 0, %s89
    %s90 = sphi 0, %s87
    %s91 = sphi 0, %s90
    %s107 = sphi 0, %s91
  $region4: #{tpu_custom_call.1} parent=0 // loop_header_branch
    %12 = sbr.rel (%p10) target = $region8
  $region5: #{tpu_custom_call.1} parent=0 // loop_body
    %s14 = ssub.s32 %s9, 1
    %s15 = ssub.s32 %s9, 2
    %s16 = sadd.s32 %s9, 1
    %s17 = ssub.s32 %s9, %s16
    %p18 = scmp.eq.s32.totalorder %s17, 0
    %s20 = sadd.s32 %s19, 1
    %s21 = scalar_select %p18, %s19, %s20
    %p24 = pneg %p18
    %p25 = scmp.eq.s32.totalorder %s9, 1
    %p26 = por %p24, %p25
    %p27 = scmp.ne.s32.totalorder %s19, %s22
    %p28 = scmp.eq.s32.totalorder %s9, 0
    %p29 = por %p27, %p28
    %p30 = scmp.ne.s32.totalorder %s19, %s22
    %p31 = scmp.eq.s32.totalorder %s14, 1
    %p32 = por %p30, %p31
    %p33 = scmp.ne.s32.totalorder %s22, %s23
    %p34 = scmp.eq.s32.totalorder %s14, 0
    %p35 = por %p33, %p34
    %p36 = scmp.ne.s32.totalorder %s22, %s23
    %p37 = scmp.eq.s32.totalorder %s15, 1
    %p38 = por %p36, %p37
    %p40 = scmp.ne.s32.totalorder %s23, %s39
    %p41 = scmp.eq.s32.totalorder %s15, 0
    %p42 = por %p40, %p41
    %s44 = sadd.s32 %s43, 1
    %p47 = scmp.eq.s32.totalorder %s9, 1
    %p48 = scmp.ne.s32.totalorder %s43, %s45
    %p49 = scmp.eq.s32.totalorder %s9, 0
    %p50 = por %p48, %p49
    %p51 = scmp.ne.s32.totalorder %s43, %s45
    %p52 = scmp.eq.s32.totalorder %s14, 1
    %p53 = por %p51, %p52
    %p54 = scmp.ne.s32.totalorder %s45, %s46
    %p55 = scmp.eq.s32.totalorder %s14, 0
    %p56 = por %p54, %p55
    %p57 = scmp.ne.s32.totalorder %s45, %s46
    %p58 = scmp.eq.s32.totalorder %s15, 1
    %p59 = por %p57, %p58
    %p61 = scmp.ne.s32.totalorder %s46, %s60
    %p62 = scmp.eq.s32.totalorder %s15, 0
    %p63 = por %p61, %p62
    %s65 = sadd.s32 %s64, 1
    %p68 = scmp.eq.s32.totalorder %s9, 1
    %p69 = scmp.ne.s32.totalorder %s64, %s66
    %p70 = scmp.eq.s32.totalorder %s9, 0
    %p71 = por %p69, %p70
    %p72 = scmp.ne.s32.totalorder %s64, %s66
    %p73 = scmp.eq.s32.totalorder %s14, 1
    %p74 = por %p72, %p73
    %p75 = scmp.ne.s32.totalorder %s66, %s67
    %p76 = scmp.eq.s32.totalorder %s14, 0
    %p77 = por %p75, %p76
    %p78 = scmp.ne.s32.totalorder %s66, %s67
    %p79 = scmp.eq.s32.totalorder %s15, 1
    %p80 = por %p78, %p79
    %p82 = scmp.ne.s32.totalorder %s67, %s81
    %p83 = scmp.eq.s32.totalorder %s15, 0
    %p84 = por %p82, %p83
    %s85 = ssub.s32 %s9, %s16
    %p86 = scmp.eq.s32.totalorder %s85, 0
    %s88 = sadd.s32 %s87, 1
    %s89 = scalar_select %p86, %s87, %s88
    %p92 = pneg %p86
    %p93 = scmp.eq.s32.totalorder %s9, 1
    %p94 = por %p92, %p93
    %p95 = scmp.ne.s32.totalorder %s87, %s90
    %p96 = scmp.eq.s32.totalorder %s9, 0
    %p97 = por %p95, %p96
    %p98 = scmp.ne.s32.totalorder %s87, %s90
    %p99 = scmp.eq.s32.totalorder %s14, 1
    %p100 = por %p98, %p99
    %p101 = scmp.ne.s32.totalorder %s90, %s91
    %p102 = scmp.eq.s32.totalorder %s14, 0
    %p103 = por %p101, %p102
    %p104 = scmp.ne.s32.totalorder %s90, %s91
    %p105 = scmp.eq.s32.totalorder %s15, 1
    %p106 = por %p104, %p105
    %p108 = scmp.ne.s32.totalorder %s91, %s107
    %p109 = scmp.eq.s32.totalorder %s15, 0
    %p110 = por %p108, %p109
    %p111 = scmp.le.s32.totalorder 1, %s9
    %p112 = scmp.lt.s32.totalorder %s9, 3
    %p113 = pnand %p111, %p112
    %p114 = pneg %p113
    // Predicated region
    $region9: #{tpu_custom_call.1} parent=5 // pred_check
      _
    $region10: #{tpu_custom_call.1} parent=5 // pred_check_branch
      %116 = sbr.rel (%p113) target = $region12
    $region11: #{tpu_custom_call.1} parent=5 // pred_region
      %s117 = ssub.s32 %s9, 1
      // Predicated region
      $region13: #{tpu_custom_call.1} parent=11 // pred_check
        %p118 = pneg %p56
      $region14: #{tpu_custom_call.1} parent=11 // pred_check_branch
        %120 = sbr.rel (%p118) target = $region16
      $region15: #{tpu_custom_call.1} parent=11 // pred_region
        _
      $region16: #{tpu_custom_call.1} parent=11 // pred_fallthru
        _
      // Predicated region
      $region17: #{tpu_custom_call.1} parent=11 // pred_check
        %p121 = pneg %p77
      $region18: #{tpu_custom_call.1} parent=11 // pred_check_branch
        %123 = sbr.rel (%p121) target = $region20
      $region19: #{tpu_custom_call.1} parent=11 // pred_region
        _
      $region20: #{tpu_custom_call.1} parent=11 // pred_fallthru
        _
    $region12: #{tpu_custom_call.1} parent=5 // pred_fallthru
      _
    %p124 = scmp.lt.s32.totalorder %s9, 2
    // Predicated region
    $region21: #{tpu_custom_call.1} parent=5 // pred_check
      %p125 = pneg %p124
    $region22: #{tpu_custom_call.1} parent=5 // pred_check_branch
      %127 = sbr.rel (%p125) target = $region24
    $region23: #{tpu_custom_call.1} parent=5 // pred_region
      // Predicated region
      $region25: #{tpu_custom_call.1} parent=23 // pred_check
        %p128 = pneg %p29
      $region26: #{tpu_custom_call.1} parent=23 // pred_check_branch
        %130 = sbr.rel (%p128) target = $region28
      $region27: #{tpu_custom_call.1} parent=23 // pred_region
        %s131 = smul.u32 32, %s9
        %p132 = scmp.lt.s32.totalorder %s131, 63
        %s133 = scalar_select %p132, %s131, 63
        %s134 = smul.addr %s133, 8
        %s135 = scalar_lea.vmem %s0, %s134
        %s136 = smul.u32 32, %s9
      $region28: #{tpu_custom_call.1} parent=23 // pred_fallthru
        _
    $region24: #{tpu_custom_call.1} parent=5 // pred_fallthru
      _
    %p137 = scmp.le.s32.totalorder 1, %s9
    %p138 = scmp.lt.s32.totalorder %s9, 3
    %p139 = pnand %p137, %p138
    %p140 = pneg %p139
    // Predicated region
    $region29: #{tpu_custom_call.1} parent=5 // pred_check
      _
    $region30: #{tpu_custom_call.1} parent=5 // pred_check_branch
      %142 = sbr.rel (%p139) target = $region32
    $region31: #{tpu_custom_call.1} parent=5 // pred_region
      %s143 = ssub.s32 %s9, 1
      %s144 = smul.u32 32, %s14
      %p145 = scmp.lt.s32.totalorder %s144, 63
      %s146 = scalar_select %p145, %s144, 63
      %s147 = smul.addr %s146, 8
      %s148 = scalar_lea.vmem %s0, %s147
      %p149 = pneg %p35
      %p150 = pneg %p32
      %p151 = pneg %p56
      %p152 = pneg %p53
      %p153 = pneg %p77
      %p154 = pneg %p74
      %p155 = pneg %p103
      %p156 = pneg %p100
      %s157 = smul.u32 32, %s14
      %p158 = scmp.lt.s32.totalorder %s157, 63
      %s159 = scalar_select %p158, %s157, 63
      %s160 = smul.addr %s159, 8
      %s161 = scalar_lea.vmem %s3, %s160
      %s162 = smul.u32 32, %s14
      %p163 = scmp.lt.s32.totalorder %s162, 63
      %s164 = scalar_select %p163, %s162, 63
      %s165 = smul.addr %s164, 8
      %s166 = scalar_lea.vmem %s0, %s165
      %s167 = smul.u32 32, %s14
      %s168 = smul.u32 32, %s14
      %p169 = scmp.lt.s32.totalorder %s168, 63
      %s170 = scalar_select %p169, %s168, 63
      %s171 = smul.addr %s170, 8
      %s172 = scalar_lea.vmem %s3, %s171
      %s173 = smul.u32 32, %s14
      %v174 = vld [vmem:[%s166] sm:$0xff]
      %v175 = vld [vmem:[%s166 + $0x8] sm:$0xff]
      %v176 = vld [vmem:[%s166 + $0x10] sm:$0xff]
      %v177 = vld [vmem:[%s166 + $0x18] sm:$0xff]
      %v178 = vld [vmem:[%s166 + $0x20] sm:$0xff]
      %v179 = vld [vmem:[%s166 + $0x28] sm:$0xff]
      %v180 = vld [vmem:[%s166 + $0x30] sm:$0xff]
      %v181 = vld [vmem:[%s166 + $0x38] sm:$0xff]
      %v182 = vld [vmem:[%s166 + $0x40] sm:$0xff]
      %v183 = vld [vmem:[%s166 + $0x48] sm:$0xff]
      %v184 = vld [vmem:[%s166 + $0x50] sm:$0xff]
      %v185 = vld [vmem:[%s166 + $0x58] sm:$0xff]
      %v186 = vld [vmem:[%s166 + $0x60] sm:$0xff]
      %v187 = vld [vmem:[%s166 + $0x68] sm:$0xff]
      %v188 = vld [vmem:[%s166 + $0x70] sm:$0xff]
      %v189 = vld [vmem:[%s166 + $0x78] sm:$0xff]
      %v190 = vld [vmem:[%s166 + $0x80] sm:$0xff]
      %v191 = vld [vmem:[%s166 + $0x88] sm:$0xff]
      %v192 = vld [vmem:[%s166 + $0x90] sm:$0xff]
      %v193 = vld [vmem:[%s166 + $0x98] sm:$0xff]
      %v194 = vld [vmem:[%s166 + $0xa0] sm:$0xff]
      %v195 = vld [vmem:[%s166 + $0xa8] sm:$0xff]
      %v196 = vld [vmem:[%s166 + $0xb0] sm:$0xff]
      %v197 = vld [vmem:[%s166 + $0xb8] sm:$0xff]
      %v198 = vld [vmem:[%s166 + $0xc0] sm:$0xff]
      %v199 = vld [vmem:[%s166 + $0xc8] sm:$0xff]
      %v200 = vld [vmem:[%s166 + $0xd0] sm:$0xff]
      %v201 = vld [vmem:[%s166 + $0xd8] sm:$0xff]
      %v202 = vld [vmem:[%s166 + $0xe0] sm:$0xff]
      %v203 = vld [vmem:[%s166 + $0xe8] sm:$0xff]
      %v204 = vld [vmem:[%s166 + $0xf0] sm:$0xff]
      %v205 = vld [vmem:[%s166 + $0xf8] sm:$0xff]
      %v206 = vld [vmem:[%s1] sm:$0xff]
      %v207 = vld [vmem:[%s1 + $0x8] sm:$0xff]
      %v208 = vld [vmem:[%s2] sm:$0x1]
      %v210 = vlaneseq
      %v211 = vshrl.u32 %v210, 7
      %v212 = vsub.s32 0, %v211
      %v213 = vrot.slane %v208, %v212
      %vm215 = vcmask 130048
      %v217 = vsel %vm215, %v174, 0
      %v220 = vsel %vm215, %v175, 0
      %v223 = vsel %vm215, %v176, 0
      %v226 = vsel %vm215, %v177, 0
      %v229 = vsel %vm215, %v178, 0
      %v232 = vsel %vm215, %v179, 0
      %v235 = vsel %vm215, %v180, 0
      %v238 = vsel %vm215, %v181, 0
      %v241 = vsel %vm215, %v182, 0
      %v244 = vsel %vm215, %v183, 0
      %v247 = vsel %vm215, %v184, 0
      %v250 = vsel %vm215, %v185, 0
      %v253 = vsel %vm215, %v186, 0
      %v256 = vsel %vm215, %v187, 0
      %v259 = vsel %vm215, %v188, 0
      %v262 = vsel %vm215, %v189, 0
      %v265 = vsel %vm215, %v190, 0
      %v268 = vsel %vm215, %v191, 0
      %v271 = vsel %vm215, %v192, 0
      %v274 = vsel %vm215, %v193, 0
      %v277 = vsel %vm215, %v194, 0
      %v280 = vsel %vm215, %v195, 0
      %v283 = vsel %vm215, %v196, 0
      %v286 = vsel %vm215, %v197, 0
      %v289 = vsel %vm215, %v198, 0
      %v292 = vsel %vm215, %v199, 0
      %v295 = vsel %vm215, %v200, 0
      %v298 = vsel %vm215, %v201, 0
      %v301 = vsel %vm215, %v202, 0
      %v304 = vsel %vm215, %v203, 0
      %v307 = vsel %vm215, %v204, 0
      %v310 = vsel %vm215, %v205, 0
      %312 = vmatprep.subr.mxu0 0.0
      %313 = vmatpush1.msra.mxu0 0.0
      %314 = vmatprep.subr.mxu0 0.0
      %315 = vmatpush1.msra.mxu0 0.0
      %316 = vmatprep.subr.mxu0 0.0
      %317 = vmatpush1.msra.mxu0 0.0
      %318 = vmatprep.subr.mxu0 0.0
      %319 = vmatpush1.msra.mxu0 0.0
      %320 = vmatprep.subr.mxu0 0.0
      %321 = vmatpush1.msra.mxu0 0.0
      %322 = vmatprep.subr.mxu0 0.0
      %323 = vmatpush1.msra.mxu0 0.0
      %324 = vmatprep.subr.mxu0 0.0
      %325 = vmatpush1.msra.mxu0 0.0
      %326 = vmatprep.subr.mxu0 0.0
      %327 = vmatpush1.msra.mxu0 0.0
      %328 = vmatprep.subr.mxu0 0.0
      %329 = vmatpush1.msra.mxu0 0.0
      %330 = vmatprep.subr.mxu0 0.0
      %331 = vmatpush1.msra.mxu0 0.0
      %332 = vmatprep.subr.mxu0 0.0
      %333 = vmatpush1.msra.mxu0 0.0
      %334 = vmatprep.subr.mxu0 0.0
      %335 = vmatpush1.msra.mxu0 0.0
      %336 = vmatprep.subr.mxu0 0.0
      %337 = vmatpush1.msra.mxu0 0.0
      %338 = vmatprep.subr.mxu0 0.0
      %339 = vmatpush1.msra.mxu0 0.0
      %340 = vmatprep.subr.mxu0 0.0
      %341 = vmatpush1.msra.mxu0 %v207
      %342 = vmatprep.subr.mxu0 0.0
      %343 = vmatpush1.msra.mxu0 %v206
      %344 = vmatprep.subr.mxu0 0.0
      %345 = vmatpush2.msra.mxu0 0.0
      %346 = vmatprep.subr.mxu0 0.0
      %347 = vmatpush2.msra.mxu0 0.0
      %348 = vmatprep.subr.mxu0 0.0
      %349 = vmatpush2.msra.mxu0 0.0
      %350 = vmatprep.subr.mxu0 0.0
      %351 = vmatpush2.msra.mxu0 0.0
      %352 = vmatprep.subr.mxu0 0.0
      %353 = vmatpush2.msra.mxu0 0.0
      %354 = vmatprep.subr.mxu0 0.0
      %355 = vmatpush2.msra.mxu0 0.0
      %356 = vmatprep.subr.mxu0 0.0
      %357 = vmatpush2.msra.mxu0 0.0
      %358 = vmatprep.subr.mxu0 0.0
      %359 = vmatpush2.msra.mxu0 0.0
      %360 = vmatprep.subr.mxu0 0.0
      %361 = vmatpush2.msra.mxu0 0.0
      %362 = vmatprep.subr.mxu0 0.0
      %363 = vmatpush2.msra.mxu0 0.0
      %364 = vmatprep.subr.mxu0 0.0
      %365 = vmatpush2.msra.mxu0 0.0
      %366 = vmatprep.subr.mxu0 0.0
      %367 = vmatpush2.msra.mxu0 0.0
      %368 = vmatprep.subr.mxu0 0.0
      %369 = vmatpush2.msra.mxu0 0.0
      %370 = vmatprep.subr.mxu0 0.0
      %371 = vmatpush2.msra.mxu0 0.0
      %372 = vmatprep.subr.mxu0 0.0
      %373 = vmatpush2.msra.mxu0 0.0
      %374 = vmatprep.subr.mxu0 0.0
      %375 = vmatpush2.msra.mxu0 0.0
      %376 = vmatprep.mubr.f32.mxu0 0.0
      %377 = vmatmul.mubr.f32.gmra.mxu0 %v217
      %v378 = vpop.f32.mrf.mxu0
      %v379 = vadd.f32 %v213, %v378
      %v380 = vpop.f32.mrf.mxu0
      %381 = vmatprep.mubr.f32.mxu0 0.0
      %382 = vmatmul.mubr.f32.gmra.mxu0 %v220
      %v383 = vpop.f32.mrf.mxu0
      %v384 = vadd.f32 %v213, %v383
      %v385 = vpop.f32.mrf.mxu0
      %386 = vmatprep.mubr.f32.mxu0 0.0
      %387 = vmatmul.mubr.f32.gmra.mxu0 %v223
      %v388 = vpop.f32.mrf.mxu0
      %v389 = vadd.f32 %v213, %v388
      %v390 = vpop.f32.mrf.mxu0
      %391 = vmatprep.mubr.f32.mxu0 0.0
      %392 = vmatmul.mubr.f32.gmra.mxu0 %v226
      %v393 = vpop.f32.mrf.mxu0
      %v394 = vadd.f32 %v213, %v393
      %v395 = vpop.f32.mrf.mxu0
      %396 = vmatprep.mubr.f32.mxu0 0.0
      %397 = vmatmul.mubr.f32.gmra.mxu0 %v229
      %v398 = vpop.f32.mrf.mxu0
      %v399 = vadd.f32 %v213, %v398
      %v400 = vpop.f32.mrf.mxu0
      %401 = vmatprep.mubr.f32.mxu0 0.0
      %402 = vmatmul.mubr.f32.gmra.mxu0 %v232
      %v403 = vpop.f32.mrf.mxu0
      %v404 = vadd.f32 %v213, %v403
      %v405 = vpop.f32.mrf.mxu0
      %406 = vmatprep.mubr.f32.mxu0 0.0
      %407 = vmatmul.mubr.f32.gmra.mxu0 %v235
      %v408 = vpop.f32.mrf.mxu0
      %v409 = vadd.f32 %v213, %v408
      %v410 = vpop.f32.mrf.mxu0
      %411 = vmatprep.mubr.f32.mxu0 0.0
      %412 = vmatmul.mubr.f32.gmra.mxu0 %v238
      %v413 = vpop.f32.mrf.mxu0
      %v414 = vadd.f32 %v213, %v413
      %v415 = vpop.f32.mrf.mxu0
      %416 = vmatprep.mubr.f32.mxu0 0.0
      %417 = vmatmul.mubr.f32.gmra.mxu0 %v241
      %v418 = vpop.f32.mrf.mxu0
      %v419 = vadd.f32 %v213, %v418
      %v420 = vpop.f32.mrf.mxu0
      %421 = vmatprep.mubr.f32.mxu0 0.0
      %422 = vmatmul.mubr.f32.gmra.mxu0 %v244
      %v423 = vpop.f32.mrf.mxu0
      %v424 = vadd.f32 %v213, %v423
      %v425 = vpop.f32.mrf.mxu0
      %426 = vmatprep.mubr.f32.mxu0 0.0
      %427 = vmatmul.mubr.f32.gmra.mxu0 %v247
      %v428 = vpop.f32.mrf.mxu0
      %v429 = vadd.f32 %v213, %v428
      %v430 = vpop.f32.mrf.mxu0
      %431 = vmatprep.mubr.f32.mxu0 0.0
      %432 = vmatmul.mubr.f32.gmra.mxu0 %v250
      %v433 = vpop.f32.mrf.mxu0
      %v434 = vadd.f32 %v213, %v433
      %v435 = vpop.f32.mrf.mxu0
      %436 = vmatprep.mubr.f32.mxu0 0.0
      %437 = vmatmul.mubr.f32.gmra.mxu0 %v253
      %v438 = vpop.f32.mrf.mxu0
      %v439 = vadd.f32 %v213, %v438
      %v440 = vpop.f32.mrf.mxu0
      %441 = vmatprep.mubr.f32.mxu0 0.0
      %442 = vmatmul.mubr.f32.gmra.mxu0 %v256
      %v443 = vpop.f32.mrf.mxu0
      %v444 = vadd.f32 %v213, %v443
      %v445 = vpop.f32.mrf.mxu0
      %446 = vmatprep.mubr.f32.mxu0 0.0
      %447 = vmatmul.mubr.f32.gmra.mxu0 %v259
      %v448 = vpop.f32.mrf.mxu0
      %v449 = vadd.f32 %v213, %v448
      %v450 = vpop.f32.mrf.mxu0
      %451 = vmatprep.mubr.f32.mxu0 0.0
      %452 = vmatmul.mubr.f32.gmra.mxu0 %v262
      %v453 = vpop.f32.mrf.mxu0
      %v454 = vadd.f32 %v213, %v453
      %v455 = vpop.f32.mrf.mxu0
      %456 = vmatprep.mubr.f32.mxu0 0.0
      %457 = vmatmul.mubr.f32.gmra.mxu0 %v265
      %v458 = vpop.f32.mrf.mxu0
      %v459 = vadd.f32 %v213, %v458
      %v460 = vpop.f32.mrf.mxu0
      %461 = vmatprep.mubr.f32.mxu0 0.0
      %462 = vmatmul.mubr.f32.gmra.mxu0 %v268
      %v463 = vpop.f32.mrf.mxu0
      %v464 = vadd.f32 %v213, %v463
      %v465 = vpop.f32.mrf.mxu0
      %466 = vmatprep.mubr.f32.mxu0 0.0
      %467 = vmatmul.mubr.f32.gmra.mxu0 %v271
      %v468 = vpop.f32.mrf.mxu0
      %v469 = vadd.f32 %v213, %v468
      %v470 = vpop.f32.mrf.mxu0
      %471 = vmatprep.mubr.f32.mxu0 0.0
      %472 = vmatmul.mubr.f32.gmra.mxu0 %v274
      %v473 = vpop.f32.mrf.mxu0
      %v474 = vadd.f32 %v213, %v473
      %v475 = vpop.f32.mrf.mxu0
      %476 = vmatprep.mubr.f32.mxu0 0.0
      %477 = vmatmul.mubr.f32.gmra.mxu0 %v277
      %v478 = vpop.f32.mrf.mxu0
      %v479 = vadd.f32 %v213, %v478
      %v480 = vpop.f32.mrf.mxu0
      %481 = vmatprep.mubr.f32.mxu0 0.0
      %482 = vmatmul.mubr.f32.gmra.mxu0 %v280
      %v483 = vpop.f32.mrf.mxu0
      %v484 = vadd.f32 %v213, %v483
      %v485 = vpop.f32.mrf.mxu0
      %486 = vmatprep.mubr.f32.mxu0 0.0
      %487 = vmatmul.mubr.f32.gmra.mxu0 %v283
      %v488 = vpop.f32.mrf.mxu0
      %v489 = vadd.f32 %v213, %v488
      %v490 = vpop.f32.mrf.mxu0
      %491 = vmatprep.mubr.f32.mxu0 0.0
      %492 = vmatmul.mubr.f32.gmra.mxu0 %v286
      %v493 = vpop.f32.mrf.mxu0
      %v494 = vadd.f32 %v213, %v493
      %v495 = vpop.f32.mrf.mxu0
      %496 = vmatprep.mubr.f32.mxu0 0.0
      %497 = vmatmul.mubr.f32.gmra.mxu0 %v289
      %v498 = vpop.f32.mrf.mxu0
      %v499 = vadd.f32 %v213, %v498
      %v500 = vpop.f32.mrf.mxu0
      %501 = vmatprep.mubr.f32.mxu0 0.0
      %502 = vmatmul.mubr.f32.gmra.mxu0 %v292
      %v503 = vpop.f32.mrf.mxu0
      %v504 = vadd.f32 %v213, %v503
      %v505 = vpop.f32.mrf.mxu0
      %506 = vmatprep.mubr.f32.mxu0 0.0
      %507 = vmatmul.mubr.f32.gmra.mxu0 %v295
      %v508 = vpop.f32.mrf.mxu0
      %v509 = vadd.f32 %v213, %v508
      %v510 = vpop.f32.mrf.mxu0
      %511 = vmatprep.mubr.f32.mxu0 0.0
      %512 = vmatmul.mubr.f32.gmra.mxu0 %v298
      %v513 = vpop.f32.mrf.mxu0
      %v514 = vadd.f32 %v213, %v513
      %v515 = vpop.f32.mrf.mxu0
      %516 = vmatprep.mubr.f32.mxu0 0.0
      %517 = vmatmul.mubr.f32.gmra.mxu0 %v301
      %v518 = vpop.f32.mrf.mxu0
      %v519 = vadd.f32 %v213, %v518
      %v520 = vpop.f32.mrf.mxu0
      %521 = vmatprep.mubr.f32.mxu0 0.0
      %522 = vmatmul.mubr.f32.gmra.mxu0 %v304
      %v523 = vpop.f32.mrf.mxu0
      %v524 = vadd.f32 %v213, %v523
      %v525 = vpop.f32.mrf.mxu0
      %526 = vmatprep.mubr.f32.mxu0 0.0
      %527 = vmatmul.mubr.f32.gmra.mxu0 %v307
      %v528 = vpop.f32.mrf.mxu0
      %v529 = vadd.f32 %v213, %v528
      %v530 = vpop.f32.mrf.mxu0
      %531 = vmatprep.mubr.f32.mxu0 0.0
      %532 = vmatmul.mubr.f32.gmra.mxu0 %v310
      %v533 = vpop.f32.mrf.mxu0
      %v534 = vadd.f32 %v213, %v533
      %v535 = vpop.f32.mrf.mxu0
      %536 = vdwg.mxu0
      %v537 = vsub.f32 0.0, %v379
      %v538 = vsub.f32 0.0, %v384
      %v539 = vsub.f32 0.0, %v389
      %v540 = vsub.f32 0.0, %v394
      %v541 = vsub.f32 0.0, %v399
      %v542 = vsub.f32 0.0, %v404
      %v543 = vsub.f32 0.0, %v409
      %v544 = vsub.f32 0.0, %v414
      %v545 = vsub.f32 0.0, %v419
      %v546 = vsub.f32 0.0, %v424
      %v547 = vsub.f32 0.0, %v429
      %v548 = vsub.f32 0.0, %v434
      %v549 = vsub.f32 0.0, %v439
      %v550 = vsub.f32 0.0, %v444
      %v551 = vsub.f32 0.0, %v449
      %v552 = vsub.f32 0.0, %v454
      %v553 = vsub.f32 0.0, %v459
      %v554 = vsub.f32 0.0, %v464
      %v555 = vsub.f32 0.0, %v469
      %v556 = vsub.f32 0.0, %v474
      %v557 = vsub.f32 0.0, %v479
      %v558 = vsub.f32 0.0, %v484
      %v559 = vsub.f32 0.0, %v489
      %v560 = vsub.f32 0.0, %v494
      %v561 = vsub.f32 0.0, %v499
      %v562 = vsub.f32 0.0, %v504
      %v563 = vsub.f32 0.0, %v509
      %v564 = vsub.f32 0.0, %v514
      %v565 = vsub.f32 0.0, %v519
      %v566 = vsub.f32 0.0, %v524
      %v567 = vsub.f32 0.0, %v529
      %v568 = vsub.f32 0.0, %v534
      %v569 = vmul.f32 %v537, 1.442695
      %v570 = vpow.pop %v569
      %v571 = vmul.f32 %v538, 1.442695
      %v572 = vpow.pop %v571
      %v573 = vmul.f32 %v539, 1.442695
      %v574 = vpow.pop %v573
      %v575 = vmul.f32 %v540, 1.442695
      %v576 = vpow.pop %v575
      %v577 = vmul.f32 %v541, 1.442695
      %v578 = vpow.pop %v577
      %v579 = vmul.f32 %v542, 1.442695
      %v580 = vpow.pop %v579
      %v581 = vmul.f32 %v543, 1.442695
      %v582 = vpow.pop %v581
      %v583 = vmul.f32 %v544, 1.442695
      %v584 = vpow.pop %v583
      %v585 = vmul.f32 %v545, 1.442695
      %v586 = vpow.pop %v585
      %v587 = vmul.f32 %v546, 1.442695
      %v588 = vpow.pop %v587
      %v589 = vmul.f32 %v547, 1.442695
      %v590 = vpow.pop %v589
      %v591 = vmul.f32 %v548, 1.442695
      %v592 = vpow.pop %v591
      %v593 = vmul.f32 %v549, 1.442695
      %v594 = vpow.pop %v593
      %v595 = vmul.f32 %v550, 1.442695
      %v596 = vpow.pop %v595
      %v597 = vmul.f32 %v551, 1.442695
      %v598 = vpow.pop %v597
      %v599 = vmul.f32 %v552, 1.442695
      %v600 = vpow.pop %v599
      %v601 = vmul.f32 %v553, 1.442695
      %v602 = vpow.pop %v601
      %v603 = vmul.f32 %v554, 1.442695
      %v604 = vpow.pop %v603
      %v605 = vmul.f32 %v555, 1.442695
      %v606 = vpow.pop %v605
      %v607 = vmul.f32 %v556, 1.442695
      %v608 = vpow.pop %v607
      %v609 = vmul.f32 %v557, 1.442695
      %v610 = vpow.pop %v609
      %v611 = vmul.f32 %v558, 1.442695
      %v612 = vpow.pop %v611
      %v613 = vmul.f32 %v559, 1.442695
      %v614 = vpow.pop %v613
      %v615 = vmul.f32 %v560, 1.442695
      %v616 = vpow.pop %v615
      %v617 = vmul.f32 %v561, 1.442695
      %v618 = vpow.pop %v617
      %v619 = vmul.f32 %v562, 1.442695
      %v620 = vpow.pop %v619
      %v621 = vmul.f32 %v563, 1.442695
      %v622 = vpow.pop %v621
      %v623 = vmul.f32 %v564, 1.442695
      %v624 = vpow.pop %v623
      %v625 = vmul.f32 %v565, 1.442695
      %v626 = vpow.pop %v625
      %v627 = vmul.f32 %v566, 1.442695
      %v628 = vpow.pop %v627
      %v629 = vmul.f32 %v567, 1.442695
      %v630 = vpow.pop %v629
      %v631 = vmul.f32 %v568, 1.442695
      %v632 = vpow.pop %v631
      %v633 = vadd.f32 %v570, 1.0
      %v634 = vadd.f32 %v572, 1.0
      %v635 = vadd.f32 %v574, 1.0
      %v636 = vadd.f32 %v576, 1.0
      %v637 = vadd.f32 %v578, 1.0
      %v638 = vadd.f32 %v580, 1.0
      %v639 = vadd.f32 %v582, 1.0
      %v640 = vadd.f32 %v584, 1.0
      %v641 = vadd.f32 %v586, 1.0
      %v642 = vadd.f32 %v588, 1.0
      %v643 = vadd.f32 %v590, 1.0
      %v644 = vadd.f32 %v592, 1.0
      %v645 = vadd.f32 %v594, 1.0
      %v646 = vadd.f32 %v596, 1.0
      %v647 = vadd.f32 %v598, 1.0
      %v648 = vadd.f32 %v600, 1.0
      %v649 = vadd.f32 %v602, 1.0
      %v650 = vadd.f32 %v604, 1.0
      %v651 = vadd.f32 %v606, 1.0
      %v652 = vadd.f32 %v608, 1.0
      %v653 = vadd.f32 %v610, 1.0
      %v654 = vadd.f32 %v612, 1.0
      %v655 = vadd.f32 %v614, 1.0
      %v656 = vadd.f32 %v616, 1.0
      %v657 = vadd.f32 %v618, 1.0
      %v658 = vadd.f32 %v620, 1.0
      %v659 = vadd.f32 %v622, 1.0
      %v660 = vadd.f32 %v624, 1.0
      %v661 = vadd.f32 %v626, 1.0
      %v662 = vadd.f32 %v628, 1.0
      %v663 = vadd.f32 %v630, 1.0
      %v664 = vadd.f32 %v632, 1.0
      %v665 = vrcp.pop %v633
      %v666 = vmul.f32 1.0, %v665
      %v667 = vrcp.pop %v634
      %v668 = vmul.f32 1.0, %v667
      %v669 = vrcp.pop %v635
      %v670 = vmul.f32 1.0, %v669
      %v671 = vrcp.pop %v636
      %v672 = vmul.f32 1.0, %v671
      %v673 = vrcp.pop %v637
      %v674 = vmul.f32 1.0, %v673
      %v675 = vrcp.pop %v638
      %v676 = vmul.f32 1.0, %v675
      %v677 = vrcp.pop %v639
      %v678 = vmul.f32 1.0, %v677
      %v679 = vrcp.pop %v640
      %v680 = vmul.f32 1.0, %v679
      %v681 = vrcp.pop %v641
      %v682 = vmul.f32 1.0, %v681
      %v683 = vrcp.pop %v642
      %v684 = vmul.f32 1.0, %v683
      %v685 = vrcp.pop %v643
      %v686 = vmul.f32 1.0, %v685
      %v687 = vrcp.pop %v644
      %v688 = vmul.f32 1.0, %v687
      %v689 = vrcp.pop %v645
      %v690 = vmul.f32 1.0, %v689
      %v691 = vrcp.pop %v646
      %v692 = vmul.f32 1.0, %v691
      %v693 = vrcp.pop %v647
      %v694 = vmul.f32 1.0, %v693
      %v695 = vrcp.pop %v648
      %v696 = vmul.f32 1.0, %v695
      %v697 = vrcp.pop %v649
      %v698 = vmul.f32 1.0, %v697
      %v699 = vrcp.pop %v650
      %v700 = vmul.f32 1.0, %v699
      %v701 = vrcp.pop %v651
      %v702 = vmul.f32 1.0, %v701
      %v703 = vrcp.pop %v652
      %v704 = vmul.f32 1.0, %v703
      %v705 = vrcp.pop %v653
      %v706 = vmul.f32 1.0, %v705
      %v707 = vrcp.pop %v654
      %v708 = vmul.f32 1.0, %v707
      %v709 = vrcp.pop %v655
      %v710 = vmul.f32 1.0, %v709
      %v711 = vrcp.pop %v656
      %v712 = vmul.f32 1.0, %v711
      %v713 = vrcp.pop %v657
      %v714 = vmul.f32 1.0, %v713
      %v715 = vrcp.pop %v658
      %v716 = vmul.f32 1.0, %v715
      %v717 = vrcp.pop %v659
      %v718 = vmul.f32 1.0, %v717
      %v719 = vrcp.pop %v660
      %v720 = vmul.f32 1.0, %v719
      %v721 = vrcp.pop %v661
      %v722 = vmul.f32 1.0, %v721
      %v723 = vrcp.pop %v662
      %v724 = vmul.f32 1.0, %v723
      %v725 = vrcp.pop %v663
      %v726 = vmul.f32 1.0, %v725
      %v727 = vrcp.pop %v664
      %v728 = vmul.f32 1.0, %v727
      %v729 = vmul.f32 %v379, %v666
      %v730 = vmul.f32 %v384, %v668
      %v731 = vmul.f32 %v389, %v670
      %v732 = vmul.f32 %v394, %v672
      %v733 = vmul.f32 %v399, %v674
      %v734 = vmul.f32 %v404, %v676
      %v735 = vmul.f32 %v409, %v678
      %v736 = vmul.f32 %v414, %v680
      %v737 = vmul.f32 %v419, %v682
      %v738 = vmul.f32 %v424, %v684
      %v739 = vmul.f32 %v429, %v686
      %v740 = vmul.f32 %v434, %v688
      %v741 = vmul.f32 %v439, %v690
      %v742 = vmul.f32 %v444, %v692
      %v743 = vmul.f32 %v449, %v694
      %v744 = vmul.f32 %v454, %v696
      %v745 = vmul.f32 %v459, %v698
      %v746 = vmul.f32 %v464, %v700
      %v747 = vmul.f32 %v469, %v702
      %v748 = vmul.f32 %v474, %v704
      %v749 = vmul.f32 %v479, %v706
      %v750 = vmul.f32 %v484, %v708
      %v751 = vmul.f32 %v489, %v710
      %v752 = vmul.f32 %v494, %v712
      %v753 = vmul.f32 %v499, %v714
      %v754 = vmul.f32 %v504, %v716
      %v755 = vmul.f32 %v509, %v718
      %v756 = vmul.f32 %v514, %v720
      %v757 = vmul.f32 %v519, %v722
      %v758 = vmul.f32 %v524, %v724
      %v759 = vmul.f32 %v529, %v726
      %v760 = vmul.f32 %v534, %v728
      %vm761 = vcmask 261120
      %762 = vst.msk [vmem:[%s172] sm:$0xff] %vm761, %v729
      %763 = vst.msk [vmem:[%s172 + $0x8] sm:$0xff] %vm761, %v730
      %764 = vst.msk [vmem:[%s172 + $0x10] sm:$0xff] %vm761, %v731
      %765 = vst.msk [vmem:[%s172 + $0x18] sm:$0xff] %vm761, %v732
      %766 = vst.msk [vmem:[%s172 + $0x20] sm:$0xff] %vm761, %v733
      %767 = vst.msk [vmem:[%s172 + $0x28] sm:$0xff] %vm761, %v734
      %768 = vst.msk [vmem:[%s172 + $0x30] sm:$0xff] %vm761, %v735
      %769 = vst.msk [vmem:[%s172 + $0x38] sm:$0xff] %vm761, %v736
      %770 = vst.msk [vmem:[%s172 + $0x40] sm:$0xff] %vm761, %v737
      %771 = vst.msk [vmem:[%s172 + $0x48] sm:$0xff] %vm761, %v738
      %772 = vst.msk [vmem:[%s172 + $0x50] sm:$0xff] %vm761, %v739
      %773 = vst.msk [vmem:[%s172 + $0x58] sm:$0xff] %vm761, %v740
      %774 = vst.msk [vmem:[%s172 + $0x60] sm:$0xff] %vm761, %v741
      %775 = vst.msk [vmem:[%s172 + $0x68] sm:$0xff] %vm761, %v742
      %776 = vst.msk [vmem:[%s172 + $0x70] sm:$0xff] %vm761, %v743
      %777 = vst.msk [vmem:[%s172 + $0x78] sm:$0xff] %vm761, %v744
      %778 = vst.msk [vmem:[%s172 + $0x80] sm:$0xff] %vm761, %v745
      %779 = vst.msk [vmem:[%s172 + $0x88] sm:$0xff] %vm761, %v746
      %780 = vst.msk [vmem:[%s172 + $0x90] sm:$0xff] %vm761, %v747
      %781 = vst.msk [vmem:[%s172 + $0x98] sm:$0xff] %vm761, %v748
      %782 = vst.msk [vmem:[%s172 + $0xa0] sm:$0xff] %vm761, %v749
      %783 = vst.msk [vmem:[%s172 + $0xa8] sm:$0xff] %vm761, %v750
      %784 = vst.msk [vmem:[%s172 + $0xb0] sm:$0xff] %vm761, %v751
      %785 = vst.msk [vmem:[%s172 + $0xb8] sm:$0xff] %vm761, %v752
      %786 = vst.msk [vmem:[%s172 + $0xc0] sm:$0xff] %vm761, %v753
      %787 = vst.msk [vmem:[%s172 + $0xc8] sm:$0xff] %vm761, %v754
      %788 = vst.msk [vmem:[%s172 + $0xd0] sm:$0xff] %vm761, %v755
      %789 = vst.msk [vmem:[%s172 + $0xd8] sm:$0xff] %vm761, %v756
      %790 = vst.msk [vmem:[%s172 + $0xe0] sm:$0xff] %vm761, %v757
      %791 = vst.msk [vmem:[%s172 + $0xe8] sm:$0xff] %vm761, %v758
      %792 = vst.msk [vmem:[%s172 + $0xf0] sm:$0xff] %vm761, %v759
      %793 = vst.msk [vmem:[%s172 + $0xf8] sm:$0xff] %vm761, %v760
      %s794 = smul.u32 32, %s14
      %p795 = scmp.lt.s32.totalorder %s794, 63
      %s796 = scalar_select %p795, %s794, 63
      %s797 = smul.addr %s796, 8
      %s798 = scalar_lea.vmem %s3, %s797
      // Predicated region
      $region33: #{tpu_custom_call.1} parent=31 // pred_check
        %p799 = pneg %p100
      $region34: #{tpu_custom_call.1} parent=31 // pred_check_branch
        %801 = sbr.rel (%p799) target = $region36
      $region35: #{tpu_custom_call.1} parent=31 // pred_region
        %s802 = smul.u32 32, %s14
      $region36: #{tpu_custom_call.1} parent=31 // pred_fallthru
        _
    $region32: #{tpu_custom_call.1} parent=5 // pred_fallthru
      _
    %p803 = scmp.le.s32.totalorder 2, %s9
    // Predicated region
    $region37: #{tpu_custom_call.1} parent=5 // pred_check
      %p804 = pneg %p803
    $region38: #{tpu_custom_call.1} parent=5 // pred_check_branch
      %806 = sbr.rel (%p804) target = $region40
    $region39: #{tpu_custom_call.1} parent=5 // pred_region
      %s807 = ssub.s32 %s9, 2
      // Predicated region
      $region41: #{tpu_custom_call.1} parent=39 // pred_check
        %p808 = pneg %p106
      $region42: #{tpu_custom_call.1} parent=39 // pred_check_branch
        %810 = sbr.rel (%p808) target = $region44
      $region43: #{tpu_custom_call.1} parent=39 // pred_region
        %s811 = smul.u32 32, %s15
        %p812 = scmp.lt.s32.totalorder %s811, 63
        %s813 = scalar_select %p812, %s811, 63
        %s814 = smul.addr %s813, 8
        %s815 = scalar_lea.vmem %s3, %s814
      $region44: #{tpu_custom_call.1} parent=39 // pred_fallthru
        _
    $region40: #{tpu_custom_call.1} parent=5 // pred_fallthru
      _
  $region6: #{tpu_custom_call.1} parent=0 // loop_footer
    %s13 = sadd.s32 1, %s9
  $region7: #{tpu_custom_call.1} parent=0 // loop_footer_branch
    %8 = sbr.rel target = $region3
  $region8: #{tpu_custom_call.1} parent=0 // loop_exit
    _

</llo_original>
